<compile_context>
chip_gen: v6e
topology: v6e:2x2x1
jax: 0.10.0
libtpu: 0.0.40
codegen_flags: <defaults>
</compile_context>

<pallas_src>
import functools

import jax
import jax.numpy as jnp
from jax.experimental import pallas as pl
from jax.experimental.pallas import tpu as pltpu


def _leaky(v, slope=0.01):
    # nn.LeakyReLU default negative_slope = 0.01 (max form: one vmul + one vmax)
    return jnp.maximum(v, slope * v)


def _resnet_block_1d_kernel(*refs, clip_value, identity_downsample, seq_len):
    """One batch tile per grid step.  x_ref block: (Bt*L, C_in), channels-last."""
    if identity_downsample:
        (x_ref, w1_ref, b1_ref, w3_ref, b2_ref, w5_ref, b5_ref, o_ref) = refs
        wds_ref = bds_ref = None
    else:
        (x_ref, wds_ref, bds_ref, w1_ref, b1_ref, w3_ref, b2_ref, w5_ref,
         b5_ref, o_ref) = refs

    R, _ = x_ref.shape
    L = seq_len

    x = x_ref[...]                                    # f32 (R, C_in), lane-dense
    xb = x.astype(jnp.bfloat16)

    # ---- conv path ---------------------------------------------------------
    # conv1 (k=1) + folded BN1 + leaky
    h = _leaky(jnp.dot(xb, w1_ref[...],
                       preferred_element_type=jnp.float32) + b1_ref[...])

    # conv2 (k=3, stride 1, pad 1, no bias) + folded BN2 + leaky.
    # Rows are (batch, l) flattened: shifted copies come from sublane rolls;
    # a single (R, 1) position column masks the per-sequence edge rows, which
    # is both the conv's zero padding and the cross-batch-leak guard.
    lpos = jax.lax.broadcasted_iota(jnp.int32, (R, 1), 0) % L
    h_prev = jnp.where(lpos == 0, 0.0, pltpu.roll(h, shift=1, axis=0))       # h[l-1]
    h_next = jnp.where(lpos == L - 1, 0.0, pltpu.roll(h, shift=R - 1, axis=0))  # h[l+1]
    # NOTE: kept as three small-K dots; fusing via a lane-axis concat of the
    # (sub-128-wide) activations costs a relayout that can outweigh the saved
    # MXU pushes at dim_med=16 (reviewer: "measure first").
    h2 = (jnp.dot(h_prev.astype(jnp.bfloat16), w3_ref[0],
                  preferred_element_type=jnp.float32)
          + jnp.dot(h.astype(jnp.bfloat16), w3_ref[1],
                    preferred_element_type=jnp.float32)
          + jnp.dot(h_next.astype(jnp.bfloat16), w3_ref[2],
                    preferred_element_type=jnp.float32)
          + b2_ref[...])
    h2 = _leaky(h2)

    # conv3 (k=1) + folded BN3 + leaky
    h3 = _leaky(jnp.dot(h2.astype(jnp.bfloat16), w5_ref[...],
                        preferred_element_type=jnp.float32) + b5_ref[...])

    # ---- downsample path last (shortens live ranges): 1x1 conv / identity,
    # then clip ---------------------------------------------------------------
    if identity_downsample:
        x1 = jnp.clip(x, -clip_value, clip_value)
    else:
        x1 = jnp.dot(xb, wds_ref[...],
                     preferred_element_type=jnp.float32) + bds_ref[...]
        x1 = jnp.clip(x1, -clip_value, clip_value)

    o_ref[...] = (x1 + h3).astype(o_ref.dtype)        # (R, C_out), lane-dense store


def _pick_batch_tile(B, L, c_in, c_out, c_med, target_rows=2048,
                     vmem_budget_bytes=40 * 1024 * 1024):
    """Largest divisor of B giving Bt*L rows near `target_rows`, capped at B//2
    so the grid has >= 2 steps (both v7x TensorCores), with a rough VMEM check
    (double-buffered in/out blocks + ~8 f32 (R, Cmax) intermediates)."""
    c_max = max(c_in, c_out, c_med)

    def fits(bt):
        r = bt * L
        return (2 * 4 * r * (c_in + c_out) + 8 * 4 * r * c_max) <= vmem_budget_bytes

    bt_cap = max(1, B // 2)                       # keep >= 2 grid steps when B >= 2
    start = max(1, min(bt_cap, target_rows // max(L, 1)))
    for bt in range(start, 0, -1):
        if B % bt == 0 and fits(bt) and (bt * L) % 8 == 0:
            return bt
    return B                                      # fall back to one full-batch block


def resnet_block_1d(x, params, *, dim_in, dim_out, clip_value=10.0):
    """x: (B, C_in, L) float32 (PyTorch NCL). Returns (B, C_out, L) float32."""
    # "auto permute!" branch from the PyTorch forward
    if x.shape[-2] != dim_in and x.shape[-1] == dim_in:
        x = jnp.transpose(x, (0, 2, 1))
    B, C, L = x.shape
    assert C == dim_in
    x = x.astype(jnp.float32)

    wds, bds, w1, b1, w3, b2, w5, b5 = params
    identity = (dim_in == dim_out)
    dim_med = w1.shape[1]

    # NCL -> channels-last rows (B*L, C_in): layout plumbing stays in XLA so the
    # kernel's loads/stores are full-lane-width (no vst.msk partial stores).
    x_rows = jnp.transpose(x, (0, 2, 1)).reshape(B * L, dim_in)

    Bt = _pick_batch_tile(B, L, dim_in, dim_out, dim_med)
    Rt = Bt * L

    kernel = functools.partial(
        _resnet_block_1d_kernel,
        clip_value=float(clip_value),
        identity_downsample=identity,
        seq_len=L)

    def full_spec(a):
        nd = a.ndim
        return pl.BlockSpec(a.shape, lambda b, _nd=nd: (0,) * _nd)

    # Identity downsample: wds/bds are never read -> do not DMA them at all.
    weight_args = ([] if identity else [wds, bds]) + [w1, b1, w3, b2, w5, b5]
    weight_specs = [full_spec(a) for a in weight_args]

    y_rows = pl.pallas_call(
        kernel,
        out_shape=jax.ShapeDtypeStruct((B * L, dim_out), jnp.float32),
        grid_spec=pltpu.PrefetchScalarGridSpec(
            num_scalar_prefetch=0,
            grid=(B // Bt,),
            in_specs=[pl.BlockSpec((Rt, dim_in), lambda b: (b, 0))] + weight_specs,
            out_specs=pl.BlockSpec((Rt, dim_out), lambda b: (b, 0)),
        ),
        compiler_params=pltpu.CompilerParams(
            dimension_semantics=("parallel",),   # batch tiles are independent
            vmem_limit_bytes=48 * 1024 * 1024,   # safe on v7x (64 MiB), > default on v5e/v6e
        ),
    )(x_rows, *weight_args)

    # rows -> NCL (B, C_out, L) in the wrapper (layout plumbing, not compute).
    return jnp.transpose(y_rows.reshape(B, L, dim_out), (0, 2, 1))


def init_params(key, dim_in, dim_out, dim_med):
    """Deterministic synthetic parameters; eval-mode BN folded into conv weights.

    Matmul layout is (C_in, C_out).  Weights are bf16 (MXU-native); biases f32.
    """
    k = jax.random.split(key, 8)
    f32, bf16 = jnp.float32, jnp.bfloat16

    # downsample: Conv1d(dim_in, dim_out, 1) with bias, or identity
    if dim_in == dim_out:
        wds = jnp.eye(dim_in, dtype=f32)        # unused (identity path in kernel)
        bds = jnp.zeros((1, dim_out), f32)
    else:
        wds = jax.random.normal(k[0], (dim_in, dim_out), f32) * 0.1
        bds = jax.random.normal(k[1], (1, dim_out), f32) * 0.1

    w1 = jax.random.normal(k[2], (dim_in, dim_med), f32) * 0.1
    b1 = jax.random.normal(k[3], (dim_med,), f32) * 0.1
    w3 = jax.random.normal(k[4], (3, dim_med, dim_med), f32) * 0.1   # k=3, no bias
    w5 = jax.random.normal(k[5], (dim_med, dim_out), f32) * 0.1
    b5 = jax.random.normal(k[6], (dim_out,), f32) * 0.1

    # BatchNorm (eval): gamma=1, beta=0, running_mean=0, running_var=1, eps=1e-5
    eps = 1e-5

    def bn_fold(dim):
        gamma = jnp.ones((dim,), f32)
        beta = jnp.zeros((dim,), f32)
        mean = jnp.zeros((dim,), f32)
        var = jnp.ones((dim,), f32)
        scale = gamma / jnp.sqrt(var + eps)
        return scale, beta - mean * scale

    s1, t1 = bn_fold(dim_med)
    s2, t2 = bn_fold(dim_med)
    s3, t3 = bn_fold(dim_out)

    w1f = (w1 * s1[None, :]).astype(bf16)
    b1f = (b1 * s1 + t1)[None, :]
    w3f = (w3 * s2[None, None, :]).astype(bf16)
    b2f = t2[None, :]
    w5f = (w5 * s3[None, :]).astype(bf16)
    b5f = (b5 * s3 + t3)[None, :]
    return wds.astype(bf16), bds, w1f, b1f, w3f, b2f, w5f, b5f


def _reference(x_ncl, params, *, clip_value, identity_downsample):
    """Plain-JAX reference (same bf16 matmul inputs / f32 accumulate)."""
    wds, bds, w1, b1, w3, b2, w5, b5 = params
    xk = jnp.transpose(x_ncl, (0, 2, 1)).astype(jnp.float32)          # (B, L, C)

    def mm(a, w):
        return jnp.einsum('blc,cd->bld', a.astype(jnp.bfloat16), w,
                          preferred_element_type=jnp.float32)

    if identity_downsample:
        x1 = jnp.clip(xk, -clip_value, clip_value)
    else:
        x1 = jnp.clip(mm(xk, wds) + bds, -clip_value, clip_value)
    h = _leaky(mm(xk, w1) + b1)
    zero = jnp.zeros_like(h[:, :1, :])
    h_prev = jnp.concatenate([zero, h[:, :-1, :]], axis=1)
    h_next = jnp.concatenate([h[:, 1:, :], zero], axis=1)
    h2 = _leaky(mm(h_prev, w3[0]) + mm(h, w3[1]) + mm(h_next, w3[2]) + b2)
    h3 = _leaky(mm(h2, w5) + b5)
    y = x1 + h3                                                       # (B, L, Co)
    return jnp.transpose(y, (0, 2, 1))                                # (B, Co, L)


if __name__ == "__main__":
    B, dim_in, dim_out, dim_med, L = 2, 32, 64, 16, 16
    clip_value = 10.0

    key = jax.random.PRNGKey(0)
    kx, kp = jax.random.split(key)
    x = jax.random.normal(kx, (B, dim_in, L), jnp.float32)   # PyTorch NCL layout
    params = init_params(kp, dim_in, dim_out, dim_med)

    y = resnet_block_1d(x, params, dim_in=dim_in, dim_out=dim_out,
                        clip_value=clip_value)
    y = jax.block_until_ready(y)
    assert y.shape == (B, dim_out, L)

    y_ref = _reference(x, params, clip_value=clip_value,
                       identity_downsample=(dim_in == dim_out))
    assert jnp.allclose(y, y_ref, rtol=1e-2, atol=1e-2), "mismatch vs reference"

    print("KERNEL_OK")
</pallas_src>

<mosaic_0001>
module attributes {stable_mosaic.version = 11 : i64} {
  func.func @_resnet_block_1d_kernel(%arg0: i32, %arg1: memref<16x32xf32, #tpu.memory_space<vmem>>, %arg2: memref<32x64xbf16, #tpu.memory_space<vmem>>, %arg3: memref<1x64xf32, #tpu.memory_space<vmem>>, %arg4: memref<32x16xbf16, #tpu.memory_space<vmem>>, %arg5: memref<1x16xf32, #tpu.memory_space<vmem>>, %arg6: memref<3x16x16xbf16, #tpu.memory_space<vmem>>, %arg7: memref<1x16xf32, #tpu.memory_space<vmem>>, %arg8: memref<16x64xbf16, #tpu.memory_space<vmem>>, %arg9: memref<1x64xf32, #tpu.memory_space<vmem>>, %arg10: memref<16x64xf32, #tpu.memory_space<vmem>>) attributes {dimension_semantics = [#tpu.dimension_semantics<parallel>], iteration_bounds = array<i64: 2>, scalar_prefetch = 0 : i64, scratch_operands = 0 : i64, tpu.core_type = #tpu.core_type<tc>, window_params = [{transform_indices = @transform_0, window_bounds = array<i64: 16, 32>}, {pipeline_mode = #tpu.pipeline_mode<synchronous>, transform_indices = @transform_1, window_bounds = array<i64: 32, 64>}, {pipeline_mode = #tpu.pipeline_mode<synchronous>, transform_indices = @transform_2, window_bounds = array<i64: 1, 64>}, {pipeline_mode = #tpu.pipeline_mode<synchronous>, transform_indices = @transform_3, window_bounds = array<i64: 32, 16>}, {pipeline_mode = #tpu.pipeline_mode<synchronous>, transform_indices = @transform_4, window_bounds = array<i64: 1, 16>}, {pipeline_mode = #tpu.pipeline_mode<synchronous>, transform_indices = @transform_5, window_bounds = array<i64: 3, 16, 16>}, {pipeline_mode = #tpu.pipeline_mode<synchronous>, transform_indices = @transform_6, window_bounds = array<i64: 1, 16>}, {pipeline_mode = #tpu.pipeline_mode<synchronous>, transform_indices = @transform_7, window_bounds = array<i64: 16, 64>}, {pipeline_mode = #tpu.pipeline_mode<synchronous>, transform_indices = @transform_8, window_bounds = array<i64: 1, 64>}, {transform_indices = @transform_9, window_bounds = array<i64: 16, 64>}]} {
    %c0 = arith.constant 0 : index
    %c0_0 = arith.constant 0 : index
    %0 = vector.load %arg1[%c0, %c0_0] : memref<16x32xf32, #tpu.memory_space<vmem>>, vector<16x32xf32>
    %1 = arith.truncf %0 : vector<16x32xf32> to vector<16x32xbf16>
    %c0_1 = arith.constant 0 : index
    %c0_2 = arith.constant 0 : index
    %2 = vector.load %arg4[%c0_1, %c0_2] : memref<32x16xbf16, #tpu.memory_space<vmem>>, vector<32x16xbf16>
    %cst = arith.constant dense<0.000000e+00> : vector<16x16xf32>
    %3 = tpu.matmul %1, %2, %cst {dimension_numbers = #tpu.dot_dimension_numbers<[1], [0], [0], [1], [0, 0, 1, 1], [], []>} : vector<16x32xbf16>, vector<32x16xbf16>, vector<16x16xf32> -> vector<16x16xf32>
    %c0_3 = arith.constant 0 : index
    %c0_4 = arith.constant 0 : index
    %4 = vector.load %arg5[%c0_3, %c0_4] : memref<1x16xf32, #tpu.memory_space<vmem>>, vector<1x16xf32>
    %5 = vector.broadcast %4 : vector<1x16xf32> to vector<16x16xf32>
    %6 = arith.addf %3, %5 : vector<16x16xf32>
    %cst_5 = arith.constant 0.00999999977 : f32
    %7 = vector.broadcast %cst_5 : f32 to vector<16x16xf32>
    %8 = arith.mulf %7, %6 : vector<16x16xf32>
    %9 = arith.maximumf %6, %8 : vector<16x16xf32>
    %10 = tpu.iota {dimensions = array<i32: 0>} : vector<16x1xi32>
    %c16_i32 = arith.constant 16 : i32
    %c0_i32 = arith.constant 0 : i32
    %11 = arith.cmpi eq, %c16_i32, %c0_i32 : i32
    %c1_i32 = arith.constant 1 : i32
    %12 = arith.select %11, %c1_i32, %c16_i32 : i32
    %13 = vector.broadcast %12 : i32 to vector<16x1xi32>
    %14 = arith.remsi %10, %13 : vector<16x1xi32>
    %c0_i32_6 = arith.constant 0 : i32
    %15 = vector.broadcast %c0_i32_6 : i32 to vector<16x1xi32>
    %16 = arith.cmpi ne, %14, %15 : vector<16x1xi32>
    %c0_i32_7 = arith.constant 0 : i32
    %17 = vector.broadcast %c0_i32_7 : i32 to vector<16x1xi32>
    %18 = arith.cmpi slt, %14, %17 : vector<16x1xi32>
    %c0_i32_8 = arith.constant 0 : i32
    %19 = arith.cmpi slt, %12, %c0_i32_8 : i32
    %20 = vector.broadcast %19 : i1 to vector<16x1xi1>
    %21 = vector.broadcast %20 : vector<16x1xi1> to vector<16x1xi1>
    %22 = arith.xori %18, %21 : vector<16x1xi1>
    %23 = arith.andi %22, %16 : vector<16x1xi1>
    %24 = vector.broadcast %12 : i32 to vector<16x1xi32>
    %25 = arith.addi %14, %24 : vector<16x1xi32>
    %26 = arith.select %23, %25, %14 : vector<16x1xi1>, vector<16x1xi32>
    %c0_i32_9 = arith.constant 0 : i32
    %27 = vector.broadcast %c0_i32_9 : i32 to vector<16x1xi32>
    %28 = arith.cmpi eq, %26, %27 : vector<16x1xi32>
    %c1_i32_10 = arith.constant 1 : i32
    %29 = tpu.dynamic_rotate %9 by %c1_i32_10 dim 0 : vector<16x16xf32>, i32 -> vector<16x16xf32>
    %cst_11 = arith.constant 0.000000e+00 : f32
    %30 = vector.shape_cast %28 : vector<16x1xi1> to vector<16x1xi1>
    %31 = vector.broadcast %30 : vector<16x1xi1> to vector<16x16xi1>
    %32 = vector.broadcast %cst_11 : f32 to vector<16x16xf32>
    %33 = arith.select %31, %32, %29 : vector<16x16xi1>, vector<16x16xf32>
    %c15_i32 = arith.constant 15 : i32
    %34 = vector.broadcast %c15_i32 : i32 to vector<16x1xi32>
    %35 = arith.cmpi eq, %26, %34 : vector<16x1xi32>
    %c15_i32_12 = arith.constant 15 : i32
    %36 = tpu.dynamic_rotate %9 by %c15_i32_12 dim 0 : vector<16x16xf32>, i32 -> vector<16x16xf32>
    %cst_13 = arith.constant 0.000000e+00 : f32
    %37 = vector.shape_cast %35 : vector<16x1xi1> to vector<16x1xi1>
    %38 = vector.broadcast %37 : vector<16x1xi1> to vector<16x16xi1>
    %39 = vector.broadcast %cst_13 : f32 to vector<16x16xf32>
    %40 = arith.select %38, %39, %36 : vector<16x16xi1>, vector<16x16xf32>
    %41 = arith.truncf %33 : vector<16x16xf32> to vector<16x16xbf16>
    %c0_14 = arith.constant 0 : index
    %c0_15 = arith.constant 0 : index
    %c0_16 = arith.constant 0 : index
    %42 = vector.load %arg6[%c0_14, %c0_15, %c0_16] : memref<3x16x16xbf16, #tpu.memory_space<vmem>>, vector<1x16x16xbf16>
    %43 = vector.shape_cast %42 : vector<1x16x16xbf16> to vector<16x16xbf16>
    %cst_17 = arith.constant dense<0.000000e+00> : vector<16x16xf32>
    %44 = tpu.matmul %41, %43, %cst_17 {dimension_numbers = #tpu.dot_dimension_numbers<[1], [0], [0], [1], [0, 0, 1, 1], [], []>} : vector<16x16xbf16>, vector<16x16xbf16>, vector<16x16xf32> -> vector<16x16xf32>
    %45 = arith.truncf %9 : vector<16x16xf32> to vector<16x16xbf16>
    %c1 = arith.constant 1 : index
    %c0_18 = arith.constant 0 : index
    %c0_19 = arith.constant 0 : index
    %46 = vector.load %arg6[%c1, %c0_18, %c0_19] : memref<3x16x16xbf16, #tpu.memory_space<vmem>>, vector<1x16x16xbf16>
    %47 = vector.shape_cast %46 : vector<1x16x16xbf16> to vector<16x16xbf16>
    %cst_20 = arith.constant dense<0.000000e+00> : vector<16x16xf32>
    %48 = tpu.matmul %45, %47, %cst_20 {dimension_numbers = #tpu.dot_dimension_numbers<[1], [0], [0], [1], [0, 0, 1, 1], [], []>} : vector<16x16xbf16>, vector<16x16xbf16>, vector<16x16xf32> -> vector<16x16xf32>
    %49 = arith.addf %44, %48 : vector<16x16xf32>
    %50 = arith.truncf %40 : vector<16x16xf32> to vector<16x16xbf16>
    %c2 = arith.constant 2 : index
    %c0_21 = arith.constant 0 : index
    %c0_22 = arith.constant 0 : index
    %51 = vector.load %arg6[%c2, %c0_21, %c0_22] : memref<3x16x16xbf16, #tpu.memory_space<vmem>>, vector<1x16x16xbf16>
    %52 = vector.shape_cast %51 : vector<1x16x16xbf16> to vector<16x16xbf16>
    %cst_23 = arith.constant dense<0.000000e+00> : vector<16x16xf32>
    %53 = tpu.matmul %50, %52, %cst_23 {dimension_numbers = #tpu.dot_dimension_numbers<[1], [0], [0], [1], [0, 0, 1, 1], [], []>} : vector<16x16xbf16>, vector<16x16xbf16>, vector<16x16xf32> -> vector<16x16xf32>
    %54 = arith.addf %49, %53 : vector<16x16xf32>
    %c0_24 = arith.constant 0 : index
    %c0_25 = arith.constant 0 : index
    %55 = vector.load %arg7[%c0_24, %c0_25] : memref<1x16xf32, #tpu.memory_space<vmem>>, vector<1x16xf32>
    %56 = vector.broadcast %55 : vector<1x16xf32> to vector<16x16xf32>
    %57 = arith.addf %54, %56 : vector<16x16xf32>
    %cst_26 = arith.constant 0.00999999977 : f32
    %58 = vector.broadcast %cst_26 : f32 to vector<16x16xf32>
    %59 = arith.mulf %58, %57 : vector<16x16xf32>
    %60 = arith.maximumf %57, %59 : vector<16x16xf32>
    %61 = arith.truncf %60 : vector<16x16xf32> to vector<16x16xbf16>
    %c0_27 = arith.constant 0 : index
    %c0_28 = arith.constant 0 : index
    %62 = vector.load %arg8[%c0_27, %c0_28] : memref<16x64xbf16, #tpu.memory_space<vmem>>, vector<16x64xbf16>
    %cst_29 = arith.constant dense<0.000000e+00> : vector<16x64xf32>
    %63 = tpu.matmul %61, %62, %cst_29 {dimension_numbers = #tpu.dot_dimension_numbers<[1], [0], [0], [1], [0, 0, 1, 1], [], []>} : vector<16x16xbf16>, vector<16x64xbf16>, vector<16x64xf32> -> vector<16x64xf32>
    %c0_30 = arith.constant 0 : index
    %c0_31 = arith.constant 0 : index
    %64 = vector.load %arg9[%c0_30, %c0_31] : memref<1x64xf32, #tpu.memory_space<vmem>>, vector<1x64xf32>
    %65 = vector.broadcast %64 : vector<1x64xf32> to vector<16x64xf32>
    %66 = arith.addf %63, %65 : vector<16x64xf32>
    %cst_32 = arith.constant 0.00999999977 : f32
    %67 = vector.broadcast %cst_32 : f32 to vector<16x64xf32>
    %68 = arith.mulf %67, %66 : vector<16x64xf32>
    %69 = arith.maximumf %66, %68 : vector<16x64xf32>
    %c0_33 = arith.constant 0 : index
    %c0_34 = arith.constant 0 : index
    %70 = vector.load %arg2[%c0_33, %c0_34] : memref<32x64xbf16, #tpu.memory_space<vmem>>, vector<32x64xbf16>
    %cst_35 = arith.constant dense<0.000000e+00> : vector<16x64xf32>
    %71 = tpu.matmul %1, %70, %cst_35 {dimension_numbers = #tpu.dot_dimension_numbers<[1], [0], [0], [1], [0, 0, 1, 1], [], []>} : vector<16x32xbf16>, vector<32x64xbf16>, vector<16x64xf32> -> vector<16x64xf32>
    %c0_36 = arith.constant 0 : index
    %c0_37 = arith.constant 0 : index
    %72 = vector.load %arg3[%c0_36, %c0_37] : memref<1x64xf32, #tpu.memory_space<vmem>>, vector<1x64xf32>
    %73 = vector.broadcast %72 : vector<1x64xf32> to vector<16x64xf32>
    %74 = arith.addf %71, %73 : vector<16x64xf32>
    %cst_38 = arith.constant -1.000000e+01 : f32
    %cst_39 = arith.constant 1.000000e+01 : f32
    %75 = vector.broadcast %cst_38 : f32 to vector<16x64xf32>
    %76 = arith.maximumf %75, %74 : vector<16x64xf32>
    %77 = vector.broadcast %cst_39 : f32 to vector<16x64xf32>
    %78 = arith.minimumf %77, %76 : vector<16x64xf32>
    %79 = arith.addf %78, %69 : vector<16x64xf32>
    %c0_40 = arith.constant 0 : index
    %c0_41 = arith.constant 0 : index
    %80 = vector.load %arg10[%c0_40, %c0_41] : memref<16x64xf32, #tpu.memory_space<vmem>>, vector<16x64xf32>
    tpu.vector_store %arg10[%c0_40, %c0_41], %79 {strides = array<i32>} : memref<16x64xf32, #tpu.memory_space<vmem>>, vector<16x64xf32>,
    return
  }
  func.func @transform_0(%arg0: i32) -> (i32, i32) {
    %c0_i32 = arith.constant 0 : i32
    %c0_i32_0 = arith.constant 0 : i32
    return %arg0, %c0_i32 : i32, i32
  }
  func.func @transform_1(%arg0: i32) -> (i32, i32) {
    %c0_i32 = arith.constant 0 : i32
    %c0_i32_0 = arith.constant 0 : i32
    %c0_i32_1 = arith.constant 0 : i32
    return %c0_i32, %c0_i32_0 : i32, i32
  }
  func.func @transform_2(%arg0: i32) -> (i32, i32) {
    %c0_i32 = arith.constant 0 : i32
    %c0_i32_0 = arith.constant 0 : i32
    %c0_i32_1 = arith.constant 0 : i32
    return %c0_i32, %c0_i32_0 : i32, i32
  }
  func.func @transform_3(%arg0: i32) -> (i32, i32) {
    %c0_i32 = arith.constant 0 : i32
    %c0_i32_0 = arith.constant 0 : i32
    %c0_i32_1 = arith.constant 0 : i32
    return %c0_i32, %c0_i32_0 : i32, i32
  }
  func.func @transform_4(%arg0: i32) -> (i32, i32) {
    %c0_i32 = arith.constant 0 : i32
    %c0_i32_0 = arith.constant 0 : i32
    %c0_i32_1 = arith.constant 0 : i32
    return %c0_i32, %c0_i32_0 : i32, i32
  }
  func.func @transform_5(%arg0: i32) -> (i32, i32, i32) {
    %c0_i32 = arith.constant 0 : i32
    %c0_i32_0 = arith.constant 0 : i32
    %c0_i32_1 = arith.constant 0 : i32
    %c0_i32_2 = arith.constant 0 : i32
    return %c0_i32, %c0_i32_0, %c0_i32_1 : i32, i32, i32
  }
  func.func @transform_6(%arg0: i32) -> (i32, i32) {
    %c0_i32 = arith.constant 0 : i32
    %c0_i32_0 = arith.constant 0 : i32
    %c0_i32_1 = arith.constant 0 : i32
    return %c0_i32, %c0_i32_0 : i32, i32
  }
  func.func @transform_7(%arg0: i32) -> (i32, i32) {
    %c0_i32 = arith.constant 0 : i32
    %c0_i32_0 = arith.constant 0 : i32
    %c0_i32_1 = arith.constant 0 : i32
    return %c0_i32, %c0_i32_0 : i32, i32
  }
  func.func @transform_8(%arg0: i32) -> (i32, i32) {
    %c0_i32 = arith.constant 0 : i32
    %c0_i32_0 = arith.constant 0 : i32
    %c0_i32_1 = arith.constant 0 : i32
    return %c0_i32, %c0_i32_0 : i32, i32
  }
  func.func @transform_9(%arg0: i32) -> (i32, i32) {
    %c0_i32 = arith.constant 0 : i32
    %c0_i32_0 = arith.constant 0 : i32
    return %arg0, %c0_i32 : i32, i32
  }
}

</mosaic_0001>

<llo_original>
// kernel: tpu_custom_call.1
$region0: #{tpu_custom_call.1}
  #allocation0 [shape = 'u32[]', space=smem, size = 0x4, offset = 0x4, fixed_abs, tag = 'smem constant byte address 0x4 - core index']
  #allocation1 [shape = 'u32[144,128]{1,0:T(1,128)}', space=vmem, size = 0x12000, scoped, tag = 'internal scratch']
  %s0 = inlined_call_operand.hbm [shape: f32[32,32], index: 0, kind: input, shape index: {}]
  %s1 = inlined_call_operand.hbm [shape: bf16[32,64], index: 1, kind: input, shape index: {}]
  %s2 = inlined_call_operand.vmem [shape: f32[1,64], index: 2, kind: input, shape index: {}]
  %s3 = inlined_call_operand.vmem [shape: bf16[32,16], index: 3, kind: input, shape index: {}]
  %s4 = inlined_call_operand.hbm [shape: f32[1,16], index: 4, kind: input, shape index: {}]
  %s5 = inlined_call_operand.vmem [shape: bf16[3,16,16], index: 5, kind: input, shape index: {}]
  %s6 = inlined_call_operand.vmem [shape: f32[1,16], index: 6, kind: input, shape index: {}]
  %s7 = inlined_call_operand.vmem [shape: bf16[16,64], index: 7, kind: input, shape index: {}]
  %s8 = inlined_call_operand.vmem [shape: f32[1,64], index: 8, kind: input, shape index: {}]
  %s9 = inlined_call_operand.hbm [shape: f32[32,64], index: 9, kind: output, shape index: {}]
  %s10 = sld [smem:[#allocation0]]
  $region81: #{tpu_custom_call.1} parent=0
    _
  %s12 = ssub.s32 1, %s10
  %s13 = scalar_select 0, %s12, %s10
  $region1: #{tpu_custom_call.1} parent=0
    #allocation2 [shape = 'u8[16384]{0}', space=vmem, size = 0x4000, scoped, tag = 'input window, operand 0']
    #allocation3 [shape = 's32[2]{0}', space=sflag, size = 0x8, scoped, tag = 'scoped memory for tpu_custom_call.1']
    #allocation4 [shape = 's32[2]{0}', space=sflag, size = 0x8, scoped, tag = 'scoped memory for tpu_custom_call.1']
    #allocation5 [shape = 'u8[8192]{0}', space=vmem, size = 0x2000, scoped, tag = 'input window, operand 1, single buffered']
    #allocation6 [shape = 's32[1]{0}', space=sflag, size = 0x4, scoped, tag = 'scoped memory for tpu_custom_call.1']
    #allocation7 [shape = 'u8[512]{0}', space=vmem, size = 0x400, scoped, tag = 'input window, operand 4, single buffered']
    #allocation8 [shape = 'u8[16384]{0}', space=vmem, size = 0x4000, scoped, tag = 'output window, operand 0']
    %14 = vsyncpa [#allocation3], 0
    %s15 = scalar_lea.sflag [#allocation3], 1
    %16 = vsyncpa %s15, 0
    %17 = vsyncpa [#allocation6], 0
    %18 = vsyncpa [#allocation4], 0
    %s19 = scalar_lea.sflag [#allocation4], 1
    %20 = vsyncpa %s19, 0
    loop: start=0, step=1, limit=4
    $region2: #{tpu_custom_call.1} parent=1 // loop_pre_header
      _
    $region3: #{tpu_custom_call.1} parent=1 // loop_header
      %s22 = sphi 0, %s26
      %p23 = scmp.ge.s32.totalorder %s22, 4
      %s32 = sphi 0, %s34
      %s35 = sphi 0, %s32
      %s36 = sphi 0, %s35
      %s52 = sphi 0, %s36
      %s56 = sphi 0, %s56
      %s58 = sphi 0, %s56
      %s59 = sphi 0, %s58
      %s73 = sphi 0, %s59
      %s77 = sphi 0, %s77
      %s79 = sphi 0, %s77
      %s80 = sphi 0, %s79
      %s94 = sphi 0, %s80
      %s98 = sphi 0, %s98
      %s100 = sphi 0, %s98
      %s101 = sphi 0, %s100
      %s115 = sphi 0, %s101
      %s119 = sphi 0, %s119
      %s121 = sphi 0, %s119
      %s122 = sphi 0, %s121
      %s136 = sphi 0, %s122
      %s140 = sphi 0, %s140
      %s142 = sphi 0, %s140
      %s143 = sphi 0, %s142
      %s157 = sphi 0, %s143
      %s161 = sphi 0, %s161
      %s163 = sphi 0, %s161
      %s164 = sphi 0, %s163
      %s178 = sphi 0, %s164
      %s182 = sphi 0, %s182
      %s184 = sphi 0, %s182
      %s185 = sphi 0, %s184
      %s199 = sphi 0, %s185
      %s203 = sphi 0, %s203
      %s205 = sphi 0, %s203
      %s206 = sphi 0, %s205
      %s220 = sphi 0, %s206
      %s226 = sphi 0, %s228
      %s229 = sphi 0, %s226
      %s230 = sphi 0, %s229
      %s246 = sphi 0, %s230
    $region4: #{tpu_custom_call.1} parent=1 // loop_header_branch
      %25 = sbr.rel (%p23) target = $region8
    $region5: #{tpu_custom_call.1} parent=1 // loop_body
      %s27 = ssub.s32 %s22, 1
      %s28 = ssub.s32 %s22, 2
      %s29 = sadd.s32 %s22, 1
      %s30 = ssub.s32 %s22, %s29
      %p31 = scmp.eq.s32.totalorder %s30, 0
      %s33 = sadd.s32 %s32, 1
      %s34 = scalar_select %p31, %s32, %s33
      %p37 = pneg %p31
      %p38 = scmp.eq.s32.totalorder %s22, 1
      %p39 = por %p37, %p38
      %p40 = scmp.ne.s32.totalorder %s32, %s35
      %p41 = scmp.eq.s32.totalorder %s22, 0
      %p42 = por %p40, %p41
      %p43 = scmp.ne.s32.totalorder %s32, %s35
      %p44 = scmp.eq.s32.totalorder %s27, 1
      %p45 = por %p43, %p44
      %p46 = scmp.ne.s32.totalorder %s35, %s36
      %p47 = scmp.eq.s32.totalorder %s27, 0
      %p48 = por %p46, %p47
      %p49 = scmp.ne.s32.totalorder %s35, %s36
      %p50 = scmp.eq.s32.totalorder %s28, 1
      %p51 = por %p49, %p50
      %p53 = scmp.ne.s32.totalorder %s36, %s52
      %p54 = scmp.eq.s32.totalorder %s28, 0
      %p55 = por %p53, %p54
      %s57 = sadd.s32 %s56, 1
      %p60 = scmp.eq.s32.totalorder %s22, 1
      %p61 = scmp.ne.s32.totalorder %s56, %s58
      %p62 = scmp.eq.s32.totalorder %s22, 0
      %p63 = por %p61, %p62
      %p64 = scmp.ne.s32.totalorder %s56, %s58
      %p65 = scmp.eq.s32.totalorder %s27, 1
      %p66 = por %p64, %p65
      %p67 = scmp.ne.s32.totalorder %s58, %s59
      %p68 = scmp.eq.s32.totalorder %s27, 0
      %p69 = por %p67, %p68
      %p70 = scmp.ne.s32.totalorder %s58, %s59
      %p71 = scmp.eq.s32.totalorder %s28, 1
      %p72 = por %p70, %p71
      %p74 = scmp.ne.s32.totalorder %s59, %s73
      %p75 = scmp.eq.s32.totalorder %s28, 0
      %p76 = por %p74, %p75
      %s78 = sadd.s32 %s77, 1
      %p81 = scmp.eq.s32.totalorder %s22, 1
      %p82 = scmp.ne.s32.totalorder %s77, %s79
      %p83 = scmp.eq.s32.totalorder %s22, 0
      %p84 = por %p82, %p83
      %p85 = scmp.ne.s32.totalorder %s77, %s79
      %p86 = scmp.eq.s32.totalorder %s27, 1
      %p87 = por %p85, %p86
      %p88 = scmp.ne.s32.totalorder %s79, %s80
      %p89 = scmp.eq.s32.totalorder %s27, 0
      %p90 = por %p88, %p89
      %p91 = scmp.ne.s32.totalorder %s79, %s80
      %p92 = scmp.eq.s32.totalorder %s28, 1
      %p93 = por %p91, %p92
      %p95 = scmp.ne.s32.totalorder %s80, %s94
      %p96 = scmp.eq.s32.totalorder %s28, 0
      %p97 = por %p95, %p96
      %s99 = sadd.s32 %s98, 1
      %p102 = scmp.eq.s32.totalorder %s22, 1
      %p103 = scmp.ne.s32.totalorder %s98, %s100
      %p104 = scmp.eq.s32.totalorder %s22, 0
      %p105 = por %p103, %p104
      %p106 = scmp.ne.s32.totalorder %s98, %s100
      %p107 = scmp.eq.s32.totalorder %s27, 1
      %p108 = por %p106, %p107
      %p109 = scmp.ne.s32.totalorder %s100, %s101
      %p110 = scmp.eq.s32.totalorder %s27, 0
      %p111 = por %p109, %p110
      %p112 = scmp.ne.s32.totalorder %s100, %s101
      %p113 = scmp.eq.s32.totalorder %s28, 1
      %p114 = por %p112, %p113
      %p116 = scmp.ne.s32.totalorder %s101, %s115
      %p117 = scmp.eq.s32.totalorder %s28, 0
      %p118 = por %p116, %p117
      %s120 = sadd.s32 %s119, 1
      %p123 = scmp.eq.s32.totalorder %s22, 1
      %p124 = scmp.ne.s32.totalorder %s119, %s121
      %p125 = scmp.eq.s32.totalorder %s22, 0
      %p126 = por %p124, %p125
      %p127 = scmp.ne.s32.totalorder %s119, %s121
      %p128 = scmp.eq.s32.totalorder %s27, 1
      %p129 = por %p127, %p128
      %p130 = scmp.ne.s32.totalorder %s121, %s122
      %p131 = scmp.eq.s32.totalorder %s27, 0
      %p132 = por %p130, %p131
      %p133 = scmp.ne.s32.totalorder %s121, %s122
      %p134 = scmp.eq.s32.totalorder %s28, 1
      %p135 = por %p133, %p134
      %p137 = scmp.ne.s32.totalorder %s122, %s136
      %p138 = scmp.eq.s32.totalorder %s28, 0
      %p139 = por %p137, %p138
      %s141 = sadd.s32 %s140, 1
      %p144 = scmp.eq.s32.totalorder %s22, 1
      %p145 = scmp.ne.s32.totalorder %s140, %s142
      %p146 = scmp.eq.s32.totalorder %s22, 0
      %p147 = por %p145, %p146
      %p148 = scmp.ne.s32.totalorder %s140, %s142
      %p149 = scmp.eq.s32.totalorder %s27, 1
      %p150 = por %p148, %p149
      %p151 = scmp.ne.s32.totalorder %s142, %s143
      %p152 = scmp.eq.s32.totalorder %s27, 0
      %p153 = por %p151, %p152
      %p154 = scmp.ne.s32.totalorder %s142, %s143
      %p155 = scmp.eq.s32.totalorder %s28, 1
      %p156 = por %p154, %p155
      %p158 = scmp.ne.s32.totalorder %s143, %s157
      %p159 = scmp.eq.s32.totalorder %s28, 0
      %p160 = por %p158, %p159
      %s162 = sadd.s32 %s161, 1
      %p165 = scmp.eq.s32.totalorder %s22, 1
      %p166 = scmp.ne.s32.totalorder %s161, %s163
      %p167 = scmp.eq.s32.totalorder %s22, 0
      %p168 = por %p166, %p167
      %p169 = scmp.ne.s32.totalorder %s161, %s163
      %p170 = scmp.eq.s32.totalorder %s27, 1
      %p171 = por %p169, %p170
      %p172 = scmp.ne.s32.totalorder %s163, %s164
      %p173 = scmp.eq.s32.totalorder %s27, 0
      %p174 = por %p172, %p173
      %p175 = scmp.ne.s32.totalorder %s163, %s164
      %p176 = scmp.eq.s32.totalorder %s28, 1
      %p177 = por %p175, %p176
      %p179 = scmp.ne.s32.totalorder %s164, %s178
      %p180 = scmp.eq.s32.totalorder %s28, 0
      %p181 = por %p179, %p180
      %s183 = sadd.s32 %s182, 1
      %p186 = scmp.eq.s32.totalorder %s22, 1
      %p187 = scmp.ne.s32.totalorder %s182, %s184
      %p188 = scmp.eq.s32.totalorder %s22, 0
      %p189 = por %p187, %p188
      %p190 = scmp.ne.s32.totalorder %s182, %s184
      %p191 = scmp.eq.s32.totalorder %s27, 1
      %p192 = por %p190, %p191
      %p193 = scmp.ne.s32.totalorder %s184, %s185
      %p194 = scmp.eq.s32.totalorder %s27, 0
      %p195 = por %p193, %p194
      %p196 = scmp.ne.s32.totalorder %s184, %s185
      %p197 = scmp.eq.s32.totalorder %s28, 1
      %p198 = por %p196, %p197
      %p200 = scmp.ne.s32.totalorder %s185, %s199
      %p201 = scmp.eq.s32.totalorder %s28, 0
      %p202 = por %p200, %p201
      %s204 = sadd.s32 %s203, 1
      %p207 = scmp.eq.s32.totalorder %s22, 1
      %p208 = scmp.ne.s32.totalorder %s203, %s205
      %p209 = scmp.eq.s32.totalorder %s22, 0
      %p210 = por %p208, %p209
      %p211 = scmp.ne.s32.totalorder %s203, %s205
      %p212 = scmp.eq.s32.totalorder %s27, 1
      %p213 = por %p211, %p212
      %p214 = scmp.ne.s32.totalorder %s205, %s206
      %p215 = scmp.eq.s32.totalorder %s27, 0
      %p216 = por %p214, %p215
      %p217 = scmp.ne.s32.totalorder %s205, %s206
      %p218 = scmp.eq.s32.totalorder %s28, 1
      %p219 = por %p217, %p218
      %p221 = scmp.ne.s32.totalorder %s206, %s220
      %p222 = scmp.eq.s32.totalorder %s28, 0
      %p223 = por %p221, %p222
      %s224 = ssub.s32 %s22, %s29
      %p225 = scmp.eq.s32.totalorder %s224, 0
      %s227 = sadd.s32 %s226, 1
      %s228 = scalar_select %p225, %s226, %s227
      %p231 = pneg %p225
      %p232 = scmp.eq.s32.totalorder %s22, 1
      %p233 = por %p231, %p232
      %p234 = scmp.ne.s32.totalorder %s226, %s229
      %p235 = scmp.eq.s32.totalorder %s22, 0
      %p236 = por %p234, %p235
      %p237 = scmp.ne.s32.totalorder %s226, %s229
      %p238 = scmp.eq.s32.totalorder %s27, 1
      %p239 = por %p237, %p238
      %p240 = scmp.ne.s32.totalorder %s229, %s230
      %p241 = scmp.eq.s32.totalorder %s27, 0
      %p242 = por %p240, %p241
      %p243 = scmp.ne.s32.totalorder %s229, %s230
      %p244 = scmp.eq.s32.totalorder %s28, 1
      %p245 = por %p243, %p244
      %p247 = scmp.ne.s32.totalorder %s230, %s246
      %p248 = scmp.eq.s32.totalorder %s28, 0
      %p249 = por %p247, %p248
      %p250 = scmp.le.s32.totalorder 1, %s22
      %p251 = scmp.lt.s32.totalorder %s22, 3
      %p252 = pnand %p250, %p251
      %p253 = pneg %p252
      // Predicated region
      $region9: #{tpu_custom_call.1} parent=5 // pred_check
        _
      $region10: #{tpu_custom_call.1} parent=5 // pred_check_branch
        %255 = sbr.rel (%p252) target = $region12
      $region11: #{tpu_custom_call.1} parent=5 // pred_region
        %s256 = ssub.s32 %s22, 1
        // Predicated region
        $region13: #{tpu_custom_call.1} parent=11 // pred_check
          %p257 = pneg %p69
        $region14: #{tpu_custom_call.1} parent=11 // pred_check_branch
          %259 = sbr.rel (%p257) target = $region16
        $region15: #{tpu_custom_call.1} parent=11 // pred_region
          %s261 = ssub.s32 256, 256
          %262 = vsyncadd [#allocation6], %s261
          %s263 = sshll.u32 [#allocation5], 4
          %s264 = int_to_ptr.vmem [resolvable:$true] %s263
          %269 = dma.hbm_to_vmem [thread:$0]  %s1, 256, %s264, [#allocation6], 64, 64, 4
        $region16: #{tpu_custom_call.1} parent=11 // pred_fallthru
          _
        // Predicated region
        $region17: #{tpu_custom_call.1} parent=11 // pred_check
          %p270 = pneg %p90
        $region18: #{tpu_custom_call.1} parent=11 // pred_check_branch
          %272 = sbr.rel (%p270) target = $region20
        $region19: #{tpu_custom_call.1} parent=11 // pred_region
          _
        $region20: #{tpu_custom_call.1} parent=11 // pred_fallthru
          _
        // Predicated region
        $region21: #{tpu_custom_call.1} parent=11 // pred_check
          %p273 = pneg %p111
        $region22: #{tpu_custom_call.1} parent=11 // pred_check_branch
          %275 = sbr.rel (%p273) target = $region24
        $region23: #{tpu_custom_call.1} parent=11 // pred_region
          _
        $region24: #{tpu_custom_call.1} parent=11 // pred_fallthru
          _
        // Predicated region
        $region25: #{tpu_custom_call.1} parent=11 // pred_check
          %p276 = pneg %p132
        $region26: #{tpu_custom_call.1} parent=11 // pred_check_branch
          %278 = sbr.rel (%p276) target = $region28
        $region27: #{tpu_custom_call.1} parent=11 // pred_region
          %s280 = ssub.s32 16, 16
          %281 = vsyncadd [#allocation6], %s280
          %s283 = sshll.u32 [#allocation7], 4
          %s284 = int_to_ptr.vmem [resolvable:$true] %s283
          %286 = dma.hbm_to_vmem [thread:$0]  %s4, 16, %s284, [#allocation6]
        $region28: #{tpu_custom_call.1} parent=11 // pred_fallthru
          _
        // Predicated region
        $region29: #{tpu_custom_call.1} parent=11 // pred_check
          %p287 = pneg %p153
        $region30: #{tpu_custom_call.1} parent=11 // pred_check_branch
          %289 = sbr.rel (%p287) target = $region32
        $region31: #{tpu_custom_call.1} parent=11 // pred_region
          _
        $region32: #{tpu_custom_call.1} parent=11 // pred_fallthru
          _
        // Predicated region
        $region33: #{tpu_custom_call.1} parent=11 // pred_check
          %p290 = pneg %p174
        $region34: #{tpu_custom_call.1} parent=11 // pred_check_branch
          %292 = sbr.rel (%p290) target = $region36
        $region35: #{tpu_custom_call.1} parent=11 // pred_region
          _
        $region36: #{tpu_custom_call.1} parent=11 // pred_fallthru
          _
        // Predicated region
        $region37: #{tpu_custom_call.1} parent=11 // pred_check
          %p293 = pneg %p195
        $region38: #{tpu_custom_call.1} parent=11 // pred_check_branch
          %295 = sbr.rel (%p293) target = $region40
        $region39: #{tpu_custom_call.1} parent=11 // pred_region
          _
        $region40: #{tpu_custom_call.1} parent=11 // pred_fallthru
          _
        // Predicated region
        $region41: #{tpu_custom_call.1} parent=11 // pred_check
          %p296 = pneg %p216
        $region42: #{tpu_custom_call.1} parent=11 // pred_check_branch
          %298 = sbr.rel (%p296) target = $region44
        $region43: #{tpu_custom_call.1} parent=11 // pred_region
          _
        $region44: #{tpu_custom_call.1} parent=11 // pred_fallthru
          _
      $region12: #{tpu_custom_call.1} parent=5 // pred_fallthru
        _
      %p299 = scmp.lt.s32.totalorder %s22, 2
      // Predicated region
      $region45: #{tpu_custom_call.1} parent=5 // pred_check
        %p300 = pneg %p299
      $region46: #{tpu_custom_call.1} parent=5 // pred_check_branch
        %302 = sbr.rel (%p300) target = $region48
      $region47: #{tpu_custom_call.1} parent=5 // pred_region
        // Predicated region
        $region49: #{tpu_custom_call.1} parent=47 // pred_check
          %p303 = pneg %p42
        $region50: #{tpu_custom_call.1} parent=47 // pred_check_branch
          %305 = sbr.rel (%p303) target = $region52
        $region51: #{tpu_custom_call.1} parent=47 // pred_region
          %s306 = sand.u32 %s32, 1
          %s307 = scalar_lea.sflag [#allocation3], %s306
          %s308 = sand.u32 %s32, 1
          %s309 = smul.addr %s308, 16
          %s310 = scalar_lea.vmem [#allocation2], %s309
          %s311 = smul.u32 2, %s22
          %s313 = ssub.s32 256, 256
          %314 = vsyncadd %s307, %s313
          %s315 = smul.addr %s311, 128
          %s316 = scalar_lea.hbm %s0, %s315
          %s317 = sshll.u32 %s310, 4
          %s318 = int_to_ptr.vmem [resolvable:$true] %s317
          %323 = dma.hbm_to_vmem [thread:$0]  %s316, 256, %s318, %s307, 128, 128, 8
        $region52: #{tpu_custom_call.1} parent=47 // pred_fallthru
          _
      $region48: #{tpu_custom_call.1} parent=5 // pred_fallthru
        _
      %p324 = scmp.le.s32.totalorder 1, %s22
      %p325 = scmp.lt.s32.totalorder %s22, 3
      %p326 = pnand %p324, %p325
      %p327 = pneg %p326
      // Predicated region
      $region53: #{tpu_custom_call.1} parent=5 // pred_check
        _
      $region54: #{tpu_custom_call.1} parent=5 // pred_check_branch
        %329 = sbr.rel (%p326) target = $region56
      $region55: #{tpu_custom_call.1} parent=5 // pred_region
        %s330 = ssub.s32 %s22, 1
        %s331 = sand.u32 %s35, 1
        %s332 = scalar_lea.sflag [#allocation3], %s331
        %s333 = sand.u32 %s35, 1
        %s334 = smul.addr %s333, 16
        %s335 = scalar_lea.vmem [#allocation2], %s334
        // Predicated region
        $region57: #{tpu_custom_call.1} parent=55 // pred_check
          %p336 = pneg %p48
        $region58: #{tpu_custom_call.1} parent=55 // pred_check_branch
          %338 = sbr.rel (%p336) target = $region60
        $region59: #{tpu_custom_call.1} parent=55 // pred_region
          %339 = dma.done %s332, 256
        $region60: #{tpu_custom_call.1} parent=55 // pred_fallthru
          _
        // Predicated region
        $region61: #{tpu_custom_call.1} parent=55 // pred_check
          %p340 = pneg %p69
        $region62: #{tpu_custom_call.1} parent=55 // pred_check_branch
          %342 = sbr.rel (%p340) target = $region64
        $region63: #{tpu_custom_call.1} parent=55 // pred_region
          %343 = dma.done [#allocation6], 256
        $region64: #{tpu_custom_call.1} parent=55 // pred_fallthru
          _
        // Predicated region
        $region65: #{tpu_custom_call.1} parent=55 // pred_check
          %p344 = pneg %p132
        $region66: #{tpu_custom_call.1} parent=55 // pred_check_branch
          %346 = sbr.rel (%p344) target = $region68
        $region67: #{tpu_custom_call.1} parent=55 // pred_region
          %347 = dma.done [#allocation6], 16
        $region68: #{tpu_custom_call.1} parent=55 // pred_fallthru
          _
        %s348 = sand.u32 %s35, 1
        %s349 = scalar_lea.sflag [#allocation3], %s348
        %s350 = sand.u32 %s35, 1
        %s351 = smul.addr %s350, 16
        %s352 = scalar_lea.vmem [#allocation2], %s351
        %p353 = pneg %p48
        %p354 = pneg %p45
        %p355 = pneg %p69
        %p356 = pneg %p66
        %p357 = pneg %p90
        %p358 = pneg %p87
        %p359 = pneg %p111
        %p360 = pneg %p108
        %p361 = pneg %p132
        %p362 = pneg %p129
        %p363 = pneg %p153
        %p364 = pneg %p150
        %p365 = pneg %p174
        %p366 = pneg %p171
        %p367 = pneg %p195
        %p368 = pneg %p192
        %p369 = pneg %p216
        %p370 = pneg %p213
        %p371 = pneg %p242
        %p372 = pneg %p239
        %s373 = sand.u32 %s229, 1
        %s374 = scalar_lea.sflag [#allocation4], %s373
        %s375 = sand.u32 %s229, 1
        %s376 = smul.addr %s375, 16
        %s377 = scalar_lea.vmem [#allocation8], %s376
        %s378 = smul.u32 2, %s27
        %s379 = smul.u32 2, %s27
        %v381 = vld [vmem:[%s335] sm:$0xff]
        %v382 = vld [vmem:[%s335 + $0x8] sm:$0xff]
        %v383 = vpack.c.bf16 %v382, %v381
        %v384 = vld [vmem:[%s3] sm:$0xf]
        %v385 = vld [vmem:[%s3 + $0x4] sm:$0xf]
        %v386 = vld [vmem:[%s3 + $0x8] sm:$0xf]
        %v387 = vld [vmem:[%s3 + $0xc] sm:$0xf]
        %v388 = vld [vmem:[#allocation7] sm:$0x1]
        %v390 = vlaneseq
        %v391 = vshrl.u32 %v390, 7
        %v392 = vsub.s32 0, %v391
        %v393 = vrot.slane %v388, %v392
        %v399 = vunpack.c.l.b16 %v384
        %v400 = vunpack.c.l.b16 %v385
        %v401 = vunpack.c.l.b16 %v386
        %v402 = vunpack.c.l.b16 %v387
        %v403 = vpack.c.b16 %v400, %v399
        %v404 = vpack.c.b16 %v402, %v401
        %vm407 = vcmask 261120
        %v409 = vsel %vm407, %v383, 0
        %411 = vmatprep.subr.bf16.mxu0 0
        %412 = vmatpush1.bf16.msra.mxu0 0
        %413 = vmatprep.subr.bf16.mxu0 0
        %414 = vmatpush1.bf16.msra.mxu0 0
        %415 = vmatprep.subr.bf16.mxu0 0
        %416 = vmatpush1.bf16.msra.mxu0 0
        %417 = vmatprep.subr.bf16.mxu0 0
        %418 = vmatpush1.bf16.msra.mxu0 0
        %419 = vmatprep.subr.bf16.mxu0 0
        %420 = vmatpush1.bf16.msra.mxu0 0
        %421 = vmatprep.subr.bf16.mxu0 0
        %422 = vmatpush1.bf16.msra.mxu0 0
        %423 = vmatprep.subr.bf16.mxu0 0
        %424 = vmatpush1.bf16.msra.mxu0 %v404
        %425 = vmatprep.subr.bf16.mxu0 0
        %426 = vmatpush1.bf16.msra.mxu0 %v403
        %427 = vmatprep.subr.bf16.mxu0 0
        %428 = vmatpush2.bf16.msra.mxu0 0
        %429 = vmatprep.subr.bf16.mxu0 0
        %430 = vmatpush2.bf16.msra.mxu0 0
        %431 = vmatprep.subr.bf16.mxu0 0
        %432 = vmatpush2.bf16.msra.mxu0 0
        %433 = vmatprep.subr.bf16.mxu0 0
        %434 = vmatpush2.bf16.msra.mxu0 0
        %435 = vmatprep.subr.bf16.mxu0 0
        %436 = vmatpush2.bf16.msra.mxu0 0
        %437 = vmatprep.subr.bf16.mxu0 0
        %438 = vmatpush2.bf16.msra.mxu0 0
        %439 = vmatprep.subr.bf16.mxu0 0
        %440 = vmatpush2.bf16.msra.mxu0 0
        %441 = vmatprep.subr.bf16.mxu0 0
        %442 = vmatpush2.bf16.msra.mxu0 0
        %443 = vmatprep.mubr.bf16.mxu0 0
        %444 = vmatmul.mubr.bf16.gmra.mxu0 %v409
        %v445 = vpop.f32.mrf.mxu0
        %v446 = vadd.f32 %v393, %v445
        %v447 = vpop.f32.mrf.mxu0
        %v448 = vpop.f32.mrf.mxu0
        %v449 = vadd.f32 %v393, %v448
        %v450 = vpop.f32.mrf.mxu0
        %451 = vdwg.mxu0
        %v452 = vmul.f32 %v446, 0.01
        %v453 = vmul.f32 %v449, 0.01
        %v454 = vmax.f32 %v446, %v452
        %v455 = vmax.f32 %v449, %v453
        %v456 = vlaneseq
        %v457 = vshrl.u32 %v456, 7
        %v458 = vadd.s32 %v457, 8
        %vm459 = vcmp.lt.s32.totalorder %v457, 0
        %v460 = vsub.s32 0, %v457
        %v461 = vsel %vm459, %v460, %v457
        %v462 = vshrl.u32 %v461, 4
        %v463 = vand.u32 %v461, 15
        %v464 = vsub.s32 0, %v463
        %v465 = vsel %vm459, %v464, %v463
        %vm466 = vcmp.lt.s32.totalorder %v458, 0
        %v467 = vsub.s32 0, %v458
        %v468 = vsel %vm466, %v467, %v458
        %v469 = vshrl.u32 %v468, 4
        %v470 = vand.u32 %v468, 15
        %v471 = vsub.s32 0, %v470
        %v472 = vsel %vm466, %v471, %v470
        %vm473 = vcmp.ne.s32.totalorder %v465, 0
        %vm474 = vcmp.ne.s32.totalorder %v472, 0
        %vm475 = vcmp.lt.s32.totalorder %v465, 0
        %vm476 = vcmp.lt.s32.totalorder %v472, 0
        %vm477 = vmand %vm475, %vm473
        %vm478 = vmand %vm476, %vm474
        %v479 = vadd.s32 %v465, 16
        %v480 = vadd.s32 %v472, 16
        %v481 = vsel %vm477, %v479, %v465
        %v482 = vsel %vm478, %v480, %v472
        %vm483 = vcmp.eq.s32.totalorder %v481, 0
        %vm484 = vcmp.eq.s32.totalorder %v482, 0
        %v485 = vrot.slane %v454, 7
        %v486 = vrot.slane %v455, 7
        %vm487 = vcmp.lt.s32.totalorder %v457, 1
        %v488 = vsel %vm487, %v485, %v486
        %v489 = vsel %vm487, %v486, %v485
        %v490 = vsel %vm483, 1, 0
        %v491 = vsel %vm484, 1, 0
        %vm492 = vcmp.eq.s32.totalorder %v490, 1
        %vm493 = vcmp.eq.s32.totalorder %v491, 1
        %v494 = vsel %vm492, 0.0, %v489
        %v495 = vsel %vm493, 0.0, %v488
        %vm496 = vcmp.eq.s32.totalorder %v481, 15
        %vm497 = vcmp.eq.s32.totalorder %v482, 15
        %v498 = vrot.slane %v454, 1
        %v499 = vrot.slane %v455, 1
        %vm500 = vcmp.lt.s32.totalorder %v457, 7
        %v501 = vsel %vm500, %v498, %v499
        %v502 = vsel %vm500, %v499, %v498
        %v503 = vsel %vm496, 1, 0
        %v504 = vsel %vm497, 1, 0
        %vm505 = vcmp.eq.s32.totalorder %v503, 1
        %vm506 = vcmp.eq.s32.totalorder %v504, 1
        %v507 = vsel %vm505, 0.0, %v501
        %v508 = vsel %vm506, 0.0, %v502
        %v509 = vpack.c.bf16 %v495, %v494
        %v510 = vld [vmem:[%s5] sm:$0xf]
        %v511 = vld [vmem:[%s5 + $0x4] sm:$0xf]
        %v512 = vpack.c.bf16 %v455, %v454
        %s513 = scalar_lea.vmem %s5, 8
        %v514 = vld [vmem:[%s513] sm:$0xf]
        %v515 = vld [vmem:[%s513 + $0x4] sm:$0xf]
        %v518 = vunpack.c.l.b16 %v514
        %v519 = vunpack.c.l.b16 %v515
        %v520 = vpack.c.b16 %v519, %v518
        %vm522 = vcmask 130048
        %v524 = vsel %vm522, %v512, 0
        %526 = vmatprep.subr.bf16.mxu0 0
        %527 = vmatpush1.bf16.msra.mxu0 0
        %528 = vmatprep.subr.bf16.mxu0 0
        %529 = vmatpush1.bf16.msra.mxu0 0
        %530 = vmatprep.subr.bf16.mxu0 0
        %531 = vmatpush1.bf16.msra.mxu0 0
        %532 = vmatprep.subr.bf16.mxu0 0
        %533 = vmatpush1.bf16.msra.mxu0 0
        %534 = vmatprep.subr.bf16.mxu0 0
        %535 = vmatpush1.bf16.msra.mxu0 0
        %536 = vmatprep.subr.bf16.mxu0 0
        %537 = vmatpush1.bf16.msra.mxu0 0
        %538 = vmatprep.subr.bf16.mxu0 0
        %539 = vmatpush1.bf16.msra.mxu0 0
        %540 = vmatprep.subr.bf16.mxu0 0
        %541 = vmatpush1.bf16.msra.mxu0 %v520
        %542 = vmatprep.subr.bf16.mxu0 0
        %543 = vmatpush2.bf16.msra.mxu0 0
        %544 = vmatprep.subr.bf16.mxu0 0
        %545 = vmatpush2.bf16.msra.mxu0 0
        %546 = vmatprep.subr.bf16.mxu0 0
        %547 = vmatpush2.bf16.msra.mxu0 0
        %548 = vmatprep.subr.bf16.mxu0 0
        %549 = vmatpush2.bf16.msra.mxu0 0
        %550 = vmatprep.subr.bf16.mxu0 0
        %551 = vmatpush2.bf16.msra.mxu0 0
        %552 = vmatprep.subr.bf16.mxu0 0
        %553 = vmatpush2.bf16.msra.mxu0 0
        %554 = vmatprep.subr.bf16.mxu0 0
        %555 = vmatpush2.bf16.msra.mxu0 0
        %556 = vmatprep.subr.bf16.mxu0 0
        %557 = vmatpush2.bf16.msra.mxu0 0
        %558 = vmatprep.mubr.bf16.mxu0 0
        %559 = vmatmul.mubr.bf16.gmra.mxu0 %v524
        %v560 = vpop.f32.mrf.mxu0
        %v561 = vadd.f32 0.0, %v560
        %v562 = vpop.f32.mrf.mxu0
        %v563 = vpop.f32.mrf.mxu0
        %v564 = vadd.f32 0.0, %v563
        %v565 = vpop.f32.mrf.mxu0
        %566 = vdwg.mxu0
        %v569 = vunpack.c.l.b16 %v510
        %v570 = vunpack.c.l.b16 %v511
        %v571 = vpack.c.b16 %v570, %v569
        %v574 = vsel %vm522, %v509, 0
        %576 = vmatprep.subr.bf16.mxu0 0
        %577 = vmatpush1.bf16.msra.mxu0 0
        %578 = vmatprep.subr.bf16.mxu0 0
        %579 = vmatpush1.bf16.msra.mxu0 0
        %580 = vmatprep.subr.bf16.mxu0 0
        %581 = vmatpush1.bf16.msra.mxu0 0
        %582 = vmatprep.subr.bf16.mxu0 0
        %583 = vmatpush1.bf16.msra.mxu0 0
        %584 = vmatprep.subr.bf16.mxu0 0
        %585 = vmatpush1.bf16.msra.mxu0 0
        %586 = vmatprep.subr.bf16.mxu0 0
        %587 = vmatpush1.bf16.msra.mxu0 0
        %588 = vmatprep.subr.bf16.mxu0 0
        %589 = vmatpush1.bf16.msra.mxu0 0
        %590 = vmatprep.subr.bf16.mxu0 0
        %591 = vmatpush1.bf16.msra.mxu0 %v571
        %592 = vmatprep.subr.bf16.mxu0 0
        %593 = vmatpush2.bf16.msra.mxu0 0
        %594 = vmatprep.subr.bf16.mxu0 0
        %595 = vmatpush2.bf16.msra.mxu0 0
        %596 = vmatprep.subr.bf16.mxu0 0
        %597 = vmatpush2.bf16.msra.mxu0 0
        %598 = vmatprep.subr.bf16.mxu0 0
        %599 = vmatpush2.bf16.msra.mxu0 0
        %600 = vmatprep.subr.bf16.mxu0 0
        %601 = vmatpush2.bf16.msra.mxu0 0
        %602 = vmatprep.subr.bf16.mxu0 0
        %603 = vmatpush2.bf16.msra.mxu0 0
        %604 = vmatprep.subr.bf16.mxu0 0
        %605 = vmatpush2.bf16.msra.mxu0 0
        %606 = vmatprep.subr.bf16.mxu0 0
        %607 = vmatpush2.bf16.msra.mxu0 0
        %608 = vmatprep.mubr.bf16.mxu0 0
        %609 = vmatmul.mubr.bf16.gmra.mxu0 %v574
        %v610 = vpop.f32.mrf.mxu0
        %v611 = vadd.f32 %v561, %v610
        %v612 = vpop.f32.mrf.mxu0
        %v613 = vpop.f32.mrf.mxu0
        %v614 = vadd.f32 %v564, %v613
        %v615 = vpop.f32.mrf.mxu0
        %616 = vdwg.mxu0
        %v617 = vpack.c.bf16 %v508, %v507
        %s618 = scalar_lea.vmem %s5, 16
        %v619 = vld [vmem:[%s618] sm:$0xf]
        %v620 = vld [vmem:[%s618 + $0x4] sm:$0xf]
        %v623 = vunpack.c.l.b16 %v619
        %v624 = vunpack.c.l.b16 %v620
        %v625 = vpack.c.b16 %v624, %v623
        %v628 = vsel %vm522, %v617, 0
        %630 = vmatprep.subr.bf16.mxu0 0
        %631 = vmatpush1.bf16.msra.mxu0 0
        %632 = vmatprep.subr.bf16.mxu0 0
        %633 = vmatpush1.bf16.msra.mxu0 0
        %634 = vmatprep.subr.bf16.mxu0 0
        %635 = vmatpush1.bf16.msra.mxu0 0
        %636 = vmatprep.subr.bf16.mxu0 0
        %637 = vmatpush1.bf16.msra.mxu0 0
        %638 = vmatprep.subr.bf16.mxu0 0
        %639 = vmatpush1.bf16.msra.mxu0 0
        %640 = vmatprep.subr.bf16.mxu0 0
        %641 = vmatpush1.bf16.msra.mxu0 0
        %642 = vmatprep.subr.bf16.mxu0 0
        %643 = vmatpush1.bf16.msra.mxu0 0
        %644 = vmatprep.subr.bf16.mxu0 0
        %645 = vmatpush1.bf16.msra.mxu0 %v625
        %646 = vmatprep.subr.bf16.mxu0 0
        %647 = vmatpush2.bf16.msra.mxu0 0
        %648 = vmatprep.subr.bf16.mxu0 0
        %649 = vmatpush2.bf16.msra.mxu0 0
        %650 = vmatprep.subr.bf16.mxu0 0
        %651 = vmatpush2.bf16.msra.mxu0 0
        %652 = vmatprep.subr.bf16.mxu0 0
        %653 = vmatpush2.bf16.msra.mxu0 0
        %654 = vmatprep.subr.bf16.mxu0 0
        %655 = vmatpush2.bf16.msra.mxu0 0
        %656 = vmatprep.subr.bf16.mxu0 0
        %657 = vmatpush2.bf16.msra.mxu0 0
        %658 = vmatprep.subr.bf16.mxu0 0
        %659 = vmatpush2.bf16.msra.mxu0 0
        %660 = vmatprep.subr.bf16.mxu0 0
        %661 = vmatpush2.bf16.msra.mxu0 0
        %662 = vmatprep.mubr.bf16.mxu0 0
        %663 = vmatmul.mubr.bf16.gmra.mxu0 %v628
        %v664 = vpop.f32.mrf.mxu0
        %v665 = vadd.f32 0.0, %v664
        %v666 = vpop.f32.mrf.mxu0
        %v667 = vpop.f32.mrf.mxu0
        %v668 = vadd.f32 0.0, %v667
        %v669 = vpop.f32.mrf.mxu0
        %670 = vdwg.mxu0
        %v671 = vadd.f32 %v611, %v665
        %v672 = vadd.f32 %v614, %v668
        %v673 = vld [vmem:[%s6] sm:$0x1]
        %v675 = vlaneseq
        %v676 = vshrl.u32 %v675, 7
        %v677 = vsub.s32 0, %v676
        %v678 = vrot.slane %v673, %v677
        %v680 = vadd.f32 %v671, %v678
        %v681 = vadd.f32 %v672, %v678
        %v682 = vmul.f32 %v680, 0.01
        %v683 = vmul.f32 %v681, 0.01
        %v684 = vmax.f32 %v680, %v682
        %v685 = vmax.f32 %v681, %v683
        %v686 = vpack.c.bf16 %v685, %v684
        %v687 = vld [vmem:[%s7] sm:$0xf]
        %v688 = vld [vmem:[%s7 + $0x4] sm:$0xf]
        %v689 = vld [vmem:[%s8] sm:$0x1]
        %v691 = vlaneseq
        %v692 = vshrl.u32 %v691, 7
        %v693 = vsub.s32 0, %v692
        %v694 = vrot.slane %v689, %v693
        %v698 = vunpack.c.l.b16 %v687
        %v699 = vunpack.c.l.b16 %v688
        %v700 = vpack.c.b16 %v699, %v698
        %v703 = vsel %vm522, %v686, 0
        %705 = vmatprep.subr.bf16.mxu0 0
        %706 = vmatpush1.bf16.msra.mxu0 0
        %707 = vmatprep.subr.bf16.mxu0 0
        %708 = vmatpush1.bf16.msra.mxu0 0
        %709 = vmatprep.subr.bf16.mxu0 0
        %710 = vmatpush1.bf16.msra.mxu0 0
        %711 = vmatprep.subr.bf16.mxu0 0
        %712 = vmatpush1.bf16.msra.mxu0 0
        %713 = vmatprep.subr.bf16.mxu0 0
        %714 = vmatpush1.bf16.msra.mxu0 0
        %715 = vmatprep.subr.bf16.mxu0 0
        %716 = vmatpush1.bf16.msra.mxu0 0
        %717 = vmatprep.subr.bf16.mxu0 0
        %718 = vmatpush1.bf16.msra.mxu0 0
        %719 = vmatprep.subr.bf16.mxu0 0
        %720 = vmatpush1.bf16.msra.mxu0 %v700
        %721 = vmatprep.subr.bf16.mxu0 0
        %722 = vmatpush2.bf16.msra.mxu0 0
        %723 = vmatprep.subr.bf16.mxu0 0
        %724 = vmatpush2.bf16.msra.mxu0 0
        %725 = vmatprep.subr.bf16.mxu0 0
        %726 = vmatpush2.bf16.msra.mxu0 0
        %727 = vmatprep.subr.bf16.mxu0 0
        %728 = vmatpush2.bf16.msra.mxu0 0
        %729 = vmatprep.subr.bf16.mxu0 0
        %730 = vmatpush2.bf16.msra.mxu0 0
        %731 = vmatprep.subr.bf16.mxu0 0
        %732 = vmatpush2.bf16.msra.mxu0 0
        %733 = vmatprep.subr.bf16.mxu0 0
        %734 = vmatpush2.bf16.msra.mxu0 0
        %735 = vmatprep.subr.bf16.mxu0 0
        %736 = vmatpush2.bf16.msra.mxu0 0
        %737 = vmatprep.mubr.bf16.mxu0 0
        %738 = vmatmul.mubr.bf16.gmra.mxu0 %v703
        %v739 = vpop.f32.mrf.mxu0
        %v740 = vadd.f32 %v694, %v739
        %v741 = vpop.f32.mrf.mxu0
        %v742 = vpop.f32.mrf.mxu0
        %v743 = vadd.f32 %v694, %v742
        %v744 = vpop.f32.mrf.mxu0
        %745 = vdwg.mxu0
        %v746 = vmul.f32 %v740, 0.01
        %v747 = vmul.f32 %v743, 0.01
        %v748 = vmax.f32 %v740, %v746
        %v749 = vmax.f32 %v743, %v747
        %v750 = vld [vmem:[#allocation5] sm:$0xf]
        %v751 = vld [vmem:[#allocation5 + $0x4] sm:$0xf]
        %v752 = vld [vmem:[#allocation5 + $0x8] sm:$0xf]
        %v753 = vld [vmem:[#allocation5 + $0xc] sm:$0xf]
        %v754 = vld [vmem:[%s2] sm:$0x1]
        %v756 = vlaneseq
        %v757 = vshrl.u32 %v756, 7
        %v758 = vsub.s32 0, %v757
        %v759 = vrot.slane %v754, %v758
        %v765 = vunpack.c.l.b16 %v750
        %v766 = vunpack.c.l.b16 %v751
        %v767 = vunpack.c.l.b16 %v752
        %v768 = vunpack.c.l.b16 %v753
        %v769 = vpack.c.b16 %v766, %v765
        %v770 = vpack.c.b16 %v768, %v767
        %773 = vmatprep.subr.bf16.mxu0 0
        %774 = vmatpush1.bf16.msra.mxu0 0
        %775 = vmatprep.subr.bf16.mxu0 0
        %776 = vmatpush1.bf16.msra.mxu0 0
        %777 = vmatprep.subr.bf16.mxu0 0
        %778 = vmatpush1.bf16.msra.mxu0 0
        %779 = vmatprep.subr.bf16.mxu0 0
        %780 = vmatpush1.bf16.msra.mxu0 0
        %781 = vmatprep.subr.bf16.mxu0 0
        %782 = vmatpush1.bf16.msra.mxu0 0
        %783 = vmatprep.subr.bf16.mxu0 0
        %784 = vmatpush1.bf16.msra.mxu0 0
        %785 = vmatprep.subr.bf16.mxu0 0
        %786 = vmatpush1.bf16.msra.mxu0 %v770
        %787 = vmatprep.subr.bf16.mxu0 0
        %788 = vmatpush1.bf16.msra.mxu0 %v769
        %789 = vmatprep.subr.bf16.mxu0 0
        %790 = vmatpush2.bf16.msra.mxu0 0
        %791 = vmatprep.subr.bf16.mxu0 0
        %792 = vmatpush2.bf16.msra.mxu0 0
        %793 = vmatprep.subr.bf16.mxu0 0
        %794 = vmatpush2.bf16.msra.mxu0 0
        %795 = vmatprep.subr.bf16.mxu0 0
        %796 = vmatpush2.bf16.msra.mxu0 0
        %797 = vmatprep.subr.bf16.mxu0 0
        %798 = vmatpush2.bf16.msra.mxu0 0
        %799 = vmatprep.subr.bf16.mxu0 0
        %800 = vmatpush2.bf16.msra.mxu0 0
        %801 = vmatprep.subr.bf16.mxu0 0
        %802 = vmatpush2.bf16.msra.mxu0 0
        %803 = vmatprep.subr.bf16.mxu0 0
        %804 = vmatpush2.bf16.msra.mxu0 0
        %805 = vmatprep.mubr.bf16.mxu0 0
        %806 = vmatmul.mubr.bf16.gmra.mxu0 %v409
        %v807 = vpop.f32.mrf.mxu0
        %v808 = vadd.f32 %v759, %v807
        %v809 = vpop.f32.mrf.mxu0
        %v810 = vpop.f32.mrf.mxu0
        %v811 = vadd.f32 %v759, %v810
        %v812 = vpop.f32.mrf.mxu0
        %813 = vdwg.mxu0
        %v814 = vmax.f32 %v808, -10.0
        %v815 = vmax.f32 %v811, -10.0
        %v816 = vmin.f32 %v814, 10.0
        %v817 = vmin.f32 %v815, 10.0
        %v818 = vadd.f32 %v816, %v748
        %v819 = vadd.f32 %v817, %v749
        %vm820 = vcmask 523264
        %821 = vst.msk [vmem:[%s377] sm:$0xff] %vm820, %v818
        %822 = vst.msk [vmem:[%s377 + $0x8] sm:$0xff] %vm820, %v819
        %s823 = sand.u32 %s229, 1
        %s824 = scalar_lea.sflag [#allocation4], %s823
        %s825 = sand.u32 %s229, 1
        %s826 = smul.addr %s825, 16
        %s827 = scalar_lea.vmem [#allocation8], %s826
        // Predicated region
        $region69: #{tpu_custom_call.1} parent=55 // pred_check
          %p828 = pneg %p239
        $region70: #{tpu_custom_call.1} parent=55 // pred_check_branch
          %830 = sbr.rel (%p828) target = $region72
        $region71: #{tpu_custom_call.1} parent=55 // pred_region
          %s831 = smul.u32 2, %s27
          %s833 = ssub.s32 256, 256
          %834 = vsyncadd %s824, %s833
          %s835 = smul.addr %s831, 128
          %s836 = scalar_lea.hbm %s9, %s835
          %s837 = sshll.u32 %s827, 4
          %s838 = int_to_ptr.vmem [resolvable:$true] %s837
          %843 = dma.vmem_to_hbm [thread:$0]  %s838, 256, %s836, %s824, 128, 128, 8
        $region72: #{tpu_custom_call.1} parent=55 // pred_fallthru
          _
      $region56: #{tpu_custom_call.1} parent=5 // pred_fallthru
        _
      %p844 = scmp.le.s32.totalorder 2, %s22
      // Predicated region
      $region73: #{tpu_custom_call.1} parent=5 // pred_check
        %p845 = pneg %p844
      $region74: #{tpu_custom_call.1} parent=5 // pred_check_branch
        %847 = sbr.rel (%p845) target = $region76
      $region75: #{tpu_custom_call.1} parent=5 // pred_region
        %s848 = ssub.s32 %s22, 2
        // Predicated region
        $region77: #{tpu_custom_call.1} parent=75 // pred_check
          %p849 = pneg %p245
        $region78: #{tpu_custom_call.1} parent=75 // pred_check_branch
          %851 = sbr.rel (%p849) target = $region80
        $region79: #{tpu_custom_call.1} parent=75 // pred_region
          %s852 = sand.u32 %s230, 1
          %s853 = scalar_lea.sflag [#allocation4], %s852
          %s854 = sand.u32 %s230, 1
          %s855 = smul.addr %s854, 16
          %s856 = scalar_lea.vmem [#allocation8], %s855
          %857 = dma.done %s853, 256
        $region80: #{tpu_custom_call.1} parent=75 // pred_fallthru
          _
      $region76: #{tpu_custom_call.1} parent=5 // pred_fallthru
        _
    $region6: #{tpu_custom_call.1} parent=1 // loop_footer
      %s26 = sadd.s32 1, %s22
    $region7: #{tpu_custom_call.1} parent=1 // loop_footer_branch
      %21 = sbr.rel target = $region3
    $region8: #{tpu_custom_call.1} parent=1 // loop_exit
      _
    %858 = vsyncpa [#allocation3], 1
    %s859 = scalar_lea.sflag [#allocation3], 1
    %860 = vsyncpa %s859, 1
    %861 = vsyncpa [#allocation6], 1
    %862 = vsyncpa [#allocation4], 1
    %s863 = scalar_lea.sflag [#allocation4], 1
    %864 = vsyncpa %s863, 1

</llo_original>
